<compile_context>
chip_gen: v5e
topology: v5e:2x2
jax: 0.10.0
libtpu: 0.0.40
codegen_flags: <defaults>
</compile_context>

<pallas_src>
import functools

import jax
import jax.numpy as jnp
from jax.experimental import pallas as pl
from jax.experimental.pallas import tpu as pltpu

CONV_EMBEDDING_DIM = 64
CONV_EMBEDDING_INPUT_CHANNELS = 3
CONV_EMBEDDING_KERNEL_SIZE = 7
CONV_EMBEDDING_PADDING_SIZE = 2
CONV_EMBEDDING_STRIDE = 4
BN_EPS = 1e-5

_TILE_M_MAX = 2048   # M columns per grid step (lane dim of every tile)
_LANE = 128


def _round_up(x, m):
    return (x + m - 1) // m * m


def _conv_stats_kernel(pT_ref, wT_ref, mm_ref, sum_ref, sumsq_ref):
    """Conv tile (as matmul) + per-channel sum / sum-of-squares.

    pT_ref:  [CKKp, TILE_M]  zero-padded patches (pad rows/cols contribute 0)
    wT_ref:  [E, CKKp]       flattened conv weight (resident across the grid)
    mm_ref:  [E, TILE_M]     streamed conv output (pre-BN, no bias)
    sum_ref, sumsq_ref: [E, 1] resident accumulators
    """
    @pl.when(pl.program_id(0) == 0)
    def _init():
        sum_ref[...] = jnp.zeros_like(sum_ref)
        sumsq_ref[...] = jnp.zeros_like(sumsq_ref)

    mm = jnp.dot(wT_ref[...], pT_ref[...], preferred_element_type=jnp.float32)
    mm_ref[...] = mm
    sum_ref[...] += jnp.sum(mm, axis=-1, keepdims=True)
    sumsq_ref[...] += jnp.sum(mm * mm, axis=-1, keepdims=True)


def _normalize_kernel(mm_ref, gamma_ref, beta_ref, sum_ref, sumsq_ref,
                      out_ref, *, inv_m):
    """Apply the folded training-mode BatchNorm affine to a conv tile."""
    mean = sum_ref[...] * inv_m                                    # [E, 1]
    var = jnp.maximum(sumsq_ref[...] * inv_m - mean * mean, 0.0)   # biased var
    inv_std = jax.lax.rsqrt(var + BN_EPS)
    scale = gamma_ref[...] * inv_std                               # [E, 1]
    shift = beta_ref[...] - mean * scale                           # [E, 1]
    out_ref[...] = mm_ref[...] * scale + shift                     # [E, TILE_M]


def _im2col_T(x, K, S, P):
    """x: [B, C, H, W] -> patches^T [C*K*K, B*OH*OW].

    Row order (c, kh, kw) matches weight.reshape(E, C*K*K); column order is
    (b, oh, ow). Uses only K*K strided slices (O(K^2) HLO ops).
    """
    B, C, H, W = x.shape
    OH = (H + 2 * P - K) // S + 1
    OW = (W + 2 * P - K) // S + 1
    xp = jnp.pad(x, ((0, 0), (0, 0), (P, P), (P, P)))
    cols = []
    for kh in range(K):
        for kw in range(K):
            sl = xp[:, :, kh:kh + (OH - 1) * S + 1:S, kw:kw + (OW - 1) * S + 1:S]
            cols.append(sl)                            # [B, C, OH, OW]
    patches = jnp.stack(cols, axis=2)                  # [B, C, K*K, OH, OW]
    patches = patches.reshape(B, C * K * K, OH * OW)   # (c, kh, kw) flatten
    patchesT = patches.transpose(1, 0, 2).reshape(C * K * K, B * OH * OW)
    return patchesT, OH, OW


@functools.partial(
    jax.jit, static_argnames=("kernel_size", "stride", "padding", "use_bf16"))
def conv_embedding_forward(x, weight, bias, gamma, beta,
                           kernel_size=CONV_EMBEDDING_KERNEL_SIZE,
                           stride=CONV_EMBEDDING_STRIDE,
                           padding=CONV_EMBEDDING_PADDING_SIZE,
                           use_bf16=False):
    """x: [B, C, H, W]. weight: [E, C, K, K]. Returns [B, E, OH, OW] (f32)."""
    del bias  # exactly cancelled by training-mode BatchNorm mean subtraction
    B = x.shape[0]
    E = weight.shape[0]
    K = kernel_size

    patchesT, OH, OW = _im2col_T(x, K, stride, padding)   # [CKK, M]
    CKK, M = patchesT.shape

    CKKp = _round_up(CKK, _LANE)                 # 147 -> 256: clean MXU K dim
    tile_m = min(_TILE_M_MAX, _round_up(M, _LANE))
    M_pad = _round_up(M, tile_m)
    num_tiles = M_pad // tile_m

    patchesT = jnp.pad(patchesT, ((0, CKKp - CKK), (0, M_pad - M)))
    w2T = jnp.pad(weight.reshape(E, CKK), ((0, 0), (0, CKKp - CKK)))

    mm_dtype = jnp.bfloat16 if use_bf16 else jnp.float32
    patchesT = patchesT.astype(mm_dtype)
    w2T = w2T.astype(mm_dtype)

    gamma2 = gamma.reshape(E, 1).astype(jnp.float32)
    beta2 = beta.reshape(E, 1).astype(jnp.float32)

    patch_spec = pl.BlockSpec((CKKp, tile_m), lambda m: (0, m))
    w_spec = pl.BlockSpec((E, CKKp), lambda m: (0, 0))
    vec_spec = pl.BlockSpec((E, 1), lambda m: (0, 0))
    mm_spec = pl.BlockSpec((E, tile_m), lambda m: (0, m))

    # ---- Pass 1: conv matmul per tile (streamed out) + global per-channel
    # sum / sum-of-squares (resident accumulators -> "arbitrary" M axis).
    cost1 = pl.CostEstimate(
        flops=2 * E * CKKp * M_pad,
        transcendentals=0,
        bytes_accessed=(patchesT.size * patchesT.dtype.itemsize
                        + w2T.size * w2T.dtype.itemsize
                        + E * M_pad * 4))
    conv_T, ch_sum, ch_sumsq = pl.pallas_call(
        _conv_stats_kernel,
        out_shape=(jax.ShapeDtypeStruct((E, M_pad), jnp.float32),
                   jax.ShapeDtypeStruct((E, 1), jnp.float32),
                   jax.ShapeDtypeStruct((E, 1), jnp.float32)),
        grid_spec=pltpu.PrefetchScalarGridSpec(
            num_scalar_prefetch=0,
            grid=(num_tiles,),
            in_specs=[patch_spec, w_spec],
            out_specs=(mm_spec, vec_spec, vec_spec)),
        compiler_params=pltpu.CompilerParams(
            dimension_semantics=("arbitrary",)),
        cost_estimate=cost1,
    )(patchesT, w2T)

    # ---- Pass 2: folded BN affine, in-place on the conv buffer.
    # Tiles are independent -> "parallel" (megacore sharding on v7x).
    out_T = pl.pallas_call(
        functools.partial(_normalize_kernel, inv_m=1.0 / M),
        out_shape=jax.ShapeDtypeStruct((E, M_pad), jnp.float32),
        grid_spec=pltpu.PrefetchScalarGridSpec(
            num_scalar_prefetch=0,
            grid=(num_tiles,),
            in_specs=[mm_spec, vec_spec, vec_spec, vec_spec, vec_spec],
            out_specs=mm_spec),
        compiler_params=pltpu.CompilerParams(
            dimension_semantics=("parallel",)),
        input_output_aliases={0: 0},
    )(conv_T, gamma2, beta2, ch_sum, ch_sumsq)

    # Lane-dense [E, M] -> NCHW [B, E, OH, OW] (plain-JAX layout plumbing).
    return out_T[:, :M].reshape(E, B, OH, OW).transpose(1, 0, 2, 3)


def _reference_forward(x, weight, bias, gamma, beta, stride, padding):
    """Pure-JAX reference: lax conv + training-mode batch norm (NCHW)."""
    conv = jax.lax.conv_general_dilated(
        x, weight, window_strides=(stride, stride),
        padding=((padding, padding), (padding, padding)),
        dimension_numbers=("NCHW", "OIHW", "NCHW"),
    ) + bias[None, :, None, None]
    mean = jnp.mean(conv, axis=(0, 2, 3), keepdims=True)
    var = jnp.mean((conv - mean) ** 2, axis=(0, 2, 3), keepdims=True)
    return gamma[None, :, None, None] * (conv - mean) / jnp.sqrt(var + BN_EPS) \
        + beta[None, :, None, None]


if __name__ == "__main__":
    key = jax.random.PRNGKey(0)
    k_x, k_w, k_b, k_g, k_be = jax.random.split(key, 5)

    B, C, H, W = 2, CONV_EMBEDDING_INPUT_CHANNELS, 16, 16
    E, K = CONV_EMBEDDING_DIM, CONV_EMBEDDING_KERNEL_SIZE

    x = jax.random.normal(k_x, (B, C, H, W), dtype=jnp.float32)
    # Deterministic synthetic parameters (Conv2d weight/bias, BN affine).
    weight = 0.1 * jax.random.normal(k_w, (E, C, K, K), dtype=jnp.float32)
    bias = 0.1 * jax.random.normal(k_b, (E,), dtype=jnp.float32)
    gamma = 1.0 + 0.1 * jax.random.normal(k_g, (E,), dtype=jnp.float32)
    beta = 0.1 * jax.random.normal(k_be, (E,), dtype=jnp.float32)

    ref = _reference_forward(x, weight, bias, gamma, beta,
                             CONV_EMBEDDING_STRIDE, CONV_EMBEDDING_PADDING_SIZE)

    # f32 MXU path: tight tolerance.
    out = jax.block_until_ready(
        conv_embedding_forward(x, weight, bias, gamma, beta))
    assert out.shape == (B, E, 4, 4), out.shape
    err = float(jnp.max(jnp.abs(out - ref)))
    assert jnp.allclose(out, ref, atol=1e-3, rtol=1e-3), err

    # bf16 MXU path (v6e/v7x friendly): relaxed tolerance.
    out_bf16 = jax.block_until_ready(
        conv_embedding_forward(x, weight, bias, gamma, beta, use_bf16=True))
    err_bf16 = float(jnp.max(jnp.abs(out_bf16 - ref)))
    assert jnp.allclose(out_bf16, ref, atol=1e-1, rtol=1e-1), err_bf16

    print("KERNEL_OK")
</pallas_src>

<mosaic_0001>
module attributes {stable_mosaic.version = 11 : i64} {
  func.func @_conv_stats_kernel(%arg0: i32, %arg1: memref<256x128xf32, #tpu.memory_space<vmem>>, %arg2: memref<64x256xf32, #tpu.memory_space<vmem>>, %arg3: memref<64x128xf32, #tpu.memory_space<vmem>>, %arg4: memref<64x1xf32, #tpu.memory_space<vmem>>, %arg5: memref<64x1xf32, #tpu.memory_space<vmem>>) attributes {dimension_semantics = [#tpu.dimension_semantics<arbitrary>], iteration_bounds = array<i64: 1>, scalar_prefetch = 0 : i64, scratch_operands = 0 : i64, tpu.core_type = #tpu.core_type<tc>, window_params = [{transform_indices = @transform_0, window_bounds = array<i64: 256, 128>}, {pipeline_mode = #tpu.pipeline_mode<synchronous>, transform_indices = @transform_1, window_bounds = array<i64: 64, 256>}, {transform_indices = @transform_2, window_bounds = array<i64: 64, 128>}, {pipeline_mode = #tpu.pipeline_mode<synchronous>, transform_indices = @transform_3, window_bounds = array<i64: 64, 1>}, {pipeline_mode = #tpu.pipeline_mode<synchronous>, transform_indices = @transform_4, window_bounds = array<i64: 64, 1>}]} {
    %c0_i32 = arith.constant 0 : i32
    %0 = arith.cmpi eq, %arg0, %c0_i32 : i32
    %1 = arith.extui %0 : i1 to i32
    %c0_i32_0 = arith.constant 0 : i32
    %2 = arith.cmpi ne, %1, %c0_i32_0 : i32
    scf.if %2 {
      %cst_16 = arith.constant 0.000000e+00 : f32
      %18 = vector.broadcast %cst_16 : f32 to vector<64x1xf32>
      %c0_17 = arith.constant 0 : index
      %c0_18 = arith.constant 0 : index
      %19 = vector.load %arg4[%c0_17, %c0_18] : memref<64x1xf32, #tpu.memory_space<vmem>>, vector<64x1xf32>
      tpu.vector_store %arg4[%c0_17, %c0_18], %18 {strides = array<i32>} : memref<64x1xf32, #tpu.memory_space<vmem>>, vector<64x1xf32>,
      %cst_19 = arith.constant 0.000000e+00 : f32
      %20 = vector.broadcast %cst_19 : f32 to vector<64x1xf32>
      %c0_20 = arith.constant 0 : index
      %c0_21 = arith.constant 0 : index
      %21 = vector.load %arg5[%c0_20, %c0_21] : memref<64x1xf32, #tpu.memory_space<vmem>>, vector<64x1xf32>
      tpu.vector_store %arg5[%c0_20, %c0_21], %20 {strides = array<i32>} : memref<64x1xf32, #tpu.memory_space<vmem>>, vector<64x1xf32>,
    } else {
    }
    %c0 = arith.constant 0 : index
    %c0_1 = arith.constant 0 : index
    %3 = vector.load %arg2[%c0, %c0_1] : memref<64x256xf32, #tpu.memory_space<vmem>>, vector<64x256xf32>
    %c0_2 = arith.constant 0 : index
    %c0_3 = arith.constant 0 : index
    %4 = vector.load %arg1[%c0_2, %c0_3] : memref<256x128xf32, #tpu.memory_space<vmem>>, vector<256x128xf32>
    %cst = arith.constant dense<0.000000e+00> : vector<64x128xf32>
    %5 = tpu.matmul %3, %4, %cst {dimension_numbers = #tpu.dot_dimension_numbers<[1], [0], [0], [1], [0, 0, 1, 1], [], []>} : vector<64x256xf32>, vector<256x128xf32>, vector<64x128xf32> -> vector<64x128xf32>
    %c0_4 = arith.constant 0 : index
    %c0_5 = arith.constant 0 : index
    %6 = vector.load %arg3[%c0_4, %c0_5] : memref<64x128xf32, #tpu.memory_space<vmem>>, vector<64x128xf32>
    tpu.vector_store %arg3[%c0_4, %c0_5], %5 {strides = array<i32>} : memref<64x128xf32, #tpu.memory_space<vmem>>, vector<64x128xf32>,
    %c0_6 = arith.constant 0 : index
    %c0_7 = arith.constant 0 : index
    %7 = vector.load %arg4[%c0_6, %c0_7] : memref<64x1xf32, #tpu.memory_space<vmem>>, vector<64x1xf32>
    %cst_8 = arith.constant dense<0.000000e+00> : vector<64xf32>
    %8 = vector.multi_reduction <add>, %5, %cst_8 [1] : vector<64x128xf32> to vector<64xf32>
    %9 = vector.shape_cast %8 : vector<64xf32> to vector<64x1xf32>
    %10 = arith.addf %7, %9 : vector<64x1xf32>
    %c0_9 = arith.constant 0 : index
    %c0_10 = arith.constant 0 : index
    %11 = vector.load %arg4[%c0_9, %c0_10] : memref<64x1xf32, #tpu.memory_space<vmem>>, vector<64x1xf32>
    tpu.vector_store %arg4[%c0_9, %c0_10], %10 {strides = array<i32>} : memref<64x1xf32, #tpu.memory_space<vmem>>, vector<64x1xf32>,
    %c0_11 = arith.constant 0 : index
    %c0_12 = arith.constant 0 : index
    %12 = vector.load %arg5[%c0_11, %c0_12] : memref<64x1xf32, #tpu.memory_space<vmem>>, vector<64x1xf32>
    %13 = arith.mulf %5, %5 : vector<64x128xf32>
    %cst_13 = arith.constant dense<0.000000e+00> : vector<64xf32>
    %14 = vector.multi_reduction <add>, %13, %cst_13 [1] : vector<64x128xf32> to vector<64xf32>
    %15 = vector.shape_cast %14 : vector<64xf32> to vector<64x1xf32>
    %16 = arith.addf %12, %15 : vector<64x1xf32>
    %c0_14 = arith.constant 0 : index
    %c0_15 = arith.constant 0 : index
    %17 = vector.load %arg5[%c0_14, %c0_15] : memref<64x1xf32, #tpu.memory_space<vmem>>, vector<64x1xf32>
    tpu.vector_store %arg5[%c0_14, %c0_15], %16 {strides = array<i32>} : memref<64x1xf32, #tpu.memory_space<vmem>>, vector<64x1xf32>,
    return
  }
  func.func @transform_0(%arg0: i32) -> (i32, i32) {
    %c0_i32 = arith.constant 0 : i32
    %c0_i32_0 = arith.constant 0 : i32
    return %c0_i32, %arg0 : i32, i32
  }
  func.func @transform_1(%arg0: i32) -> (i32, i32) {
    %c0_i32 = arith.constant 0 : i32
    %c0_i32_0 = arith.constant 0 : i32
    %c0_i32_1 = arith.constant 0 : i32
    return %c0_i32, %c0_i32_0 : i32, i32
  }
  func.func @transform_2(%arg0: i32) -> (i32, i32) {
    %c0_i32 = arith.constant 0 : i32
    %c0_i32_0 = arith.constant 0 : i32
    return %c0_i32, %arg0 : i32, i32
  }
  func.func @transform_3(%arg0: i32) -> (i32, i32) {
    %c0_i32 = arith.constant 0 : i32
    %c0_i32_0 = arith.constant 0 : i32
    %c0_i32_1 = arith.constant 0 : i32
    return %c0_i32, %c0_i32_0 : i32, i32
  }
  func.func @transform_4(%arg0: i32) -> (i32, i32) {
    %c0_i32 = arith.constant 0 : i32
    %c0_i32_0 = arith.constant 0 : i32
    %c0_i32_1 = arith.constant 0 : i32
    return %c0_i32, %c0_i32_0 : i32, i32
  }
}

module attributes {stable_mosaic.version = 11 : i64} {
  func.func @_normalize_kernel(%arg0: i32, %arg1: memref<64x128xf32, #tpu.memory_space<vmem>>, %arg2: memref<64x1xf32, #tpu.memory_space<vmem>>, %arg3: memref<64x1xf32, #tpu.memory_space<vmem>>, %arg4: memref<64x1xf32, #tpu.memory_space<vmem>>, %arg5: memref<64x1xf32, #tpu.memory_space<vmem>>, %arg6: memref<64x128xf32, #tpu.memory_space<vmem>>) attributes {dimension_semantics = [#tpu.dimension_semantics<parallel>], iteration_bounds = array<i64: 1>, scalar_prefetch = 0 : i64, scratch_operands = 0 : i64, tpu.core_type = #tpu.core_type<tc>, window_params = [{transform_indices = @transform_0, window_bounds = array<i64: 64, 128>}, {pipeline_mode = #tpu.pipeline_mode<synchronous>, transform_indices = @transform_1, window_bounds = array<i64: 64, 1>}, {pipeline_mode = #tpu.pipeline_mode<synchronous>, transform_indices = @transform_2, window_bounds = array<i64: 64, 1>}, {pipeline_mode = #tpu.pipeline_mode<synchronous>, transform_indices = @transform_3, window_bounds = array<i64: 64, 1>}, {pipeline_mode = #tpu.pipeline_mode<synchronous>, transform_indices = @transform_4, window_bounds = array<i64: 64, 1>}, {transform_indices = @transform_5, window_bounds = array<i64: 64, 128>}]} {
    %c0 = arith.constant 0 : index
    %c0_0 = arith.constant 0 : index
    %0 = vector.load %arg4[%c0, %c0_0] : memref<64x1xf32, #tpu.memory_space<vmem>>, vector<64x1xf32>
    %cst = arith.constant 3.125000e-02 : f32
    %1 = vector.broadcast %cst : f32 to vector<64x1xf32>
    %2 = arith.mulf %0, %1 : vector<64x1xf32>
    %c0_1 = arith.constant 0 : index
    %c0_2 = arith.constant 0 : index
    %3 = vector.load %arg5[%c0_1, %c0_2] : memref<64x1xf32, #tpu.memory_space<vmem>>, vector<64x1xf32>
    %cst_3 = arith.constant 3.125000e-02 : f32
    %4 = vector.broadcast %cst_3 : f32 to vector<64x1xf32>
    %5 = arith.mulf %3, %4 : vector<64x1xf32>
    %6 = arith.mulf %2, %2 : vector<64x1xf32>
    %7 = arith.subf %5, %6 : vector<64x1xf32>
    %cst_4 = arith.constant 0.000000e+00 : f32
    %8 = vector.broadcast %cst_4 : f32 to vector<64x1xf32>
    %9 = arith.maximumf %7, %8 : vector<64x1xf32>
    %cst_5 = arith.constant 9.99999974E-6 : f32
    %10 = vector.broadcast %cst_5 : f32 to vector<64x1xf32>
    %11 = arith.addf %9, %10 : vector<64x1xf32>
    %12 = math.rsqrt %11 : vector<64x1xf32>
    %c0_6 = arith.constant 0 : index
    %c0_7 = arith.constant 0 : index
    %13 = vector.load %arg2[%c0_6, %c0_7] : memref<64x1xf32, #tpu.memory_space<vmem>>, vector<64x1xf32>
    %14 = arith.mulf %13, %12 : vector<64x1xf32>
    %c0_8 = arith.constant 0 : index
    %c0_9 = arith.constant 0 : index
    %15 = vector.load %arg3[%c0_8, %c0_9] : memref<64x1xf32, #tpu.memory_space<vmem>>, vector<64x1xf32>
    %16 = arith.mulf %2, %14 : vector<64x1xf32>
    %17 = arith.subf %15, %16 : vector<64x1xf32>
    %c0_10 = arith.constant 0 : index
    %c0_11 = arith.constant 0 : index
    %18 = vector.load %arg1[%c0_10, %c0_11] : memref<64x128xf32, #tpu.memory_space<vmem>>, vector<64x128xf32>
    %19 = vector.broadcast %14 : vector<64x1xf32> to vector<64x128xf32>
    %20 = arith.mulf %18, %19 : vector<64x128xf32>
    %21 = vector.broadcast %17 : vector<64x1xf32> to vector<64x128xf32>
    %22 = arith.addf %20, %21 : vector<64x128xf32>
    %c0_12 = arith.constant 0 : index
    %c0_13 = arith.constant 0 : index
    %23 = vector.load %arg6[%c0_12, %c0_13] : memref<64x128xf32, #tpu.memory_space<vmem>>, vector<64x128xf32>
    tpu.vector_store %arg6[%c0_12, %c0_13], %22 {strides = array<i32>} : memref<64x128xf32, #tpu.memory_space<vmem>>, vector<64x128xf32>,
    return
  }
  func.func @transform_0(%arg0: i32) -> (i32, i32) {
    %c0_i32 = arith.constant 0 : i32
    %c0_i32_0 = arith.constant 0 : i32
    return %c0_i32, %arg0 : i32, i32
  }
  func.func @transform_1(%arg0: i32) -> (i32, i32) {
    %c0_i32 = arith.constant 0 : i32
    %c0_i32_0 = arith.constant 0 : i32
    %c0_i32_1 = arith.constant 0 : i32
    return %c0_i32, %c0_i32_0 : i32, i32
  }
  func.func @transform_2(%arg0: i32) -> (i32, i32) {
    %c0_i32 = arith.constant 0 : i32
    %c0_i32_0 = arith.constant 0 : i32
    %c0_i32_1 = arith.constant 0 : i32
    return %c0_i32, %c0_i32_0 : i32, i32
  }
  func.func @transform_3(%arg0: i32) -> (i32, i32) {
    %c0_i32 = arith.constant 0 : i32
    %c0_i32_0 = arith.constant 0 : i32
    %c0_i32_1 = arith.constant 0 : i32
    return %c0_i32, %c0_i32_0 : i32, i32
  }
  func.func @transform_4(%arg0: i32) -> (i32, i32) {
    %c0_i32 = arith.constant 0 : i32
    %c0_i32_0 = arith.constant 0 : i32
    %c0_i32_1 = arith.constant 0 : i32
    return %c0_i32, %c0_i32_0 : i32, i32
  }
  func.func @transform_5(%arg0: i32) -> (i32, i32) {
    %c0_i32 = arith.constant 0 : i32
    %c0_i32_0 = arith.constant 0 : i32
    return %c0_i32, %arg0 : i32, i32
  }
}

</mosaic_0001>

<llo_original>
// kernel: conv_embedding_forward.2
$region0: #{conv_embedding_forward.2}
  #allocation0 [shape = 'u32[]', space=smem, size = 0x4, offset = 0x4, fixed_abs, tag = 'smem constant byte address 0x4 - core index']
  #allocation1 [shape = 'u32[72,128]{1,0:T(1,128)}', space=vmem, size = 0x9000, scoped, tag = 'internal scratch']
  %s0 = inlined_call_operand.vmem [shape: f32[256,128], index: 0, kind: input, shape index: {}]
  %s1 = inlined_call_operand.vmem [shape: f32[64,256], index: 1, kind: input, shape index: {}]
  %s2 = inlined_call_operand.vmem [shape: f32[64,128], index: 2, kind: output, shape index: {0}]
  %s3 = inlined_call_operand.vmem [shape: f32[64,1], index: 3, kind: output, shape index: {1}]
  %s4 = inlined_call_operand.vmem [shape: f32[64,1], index: 4, kind: output, shape index: {2}]
  %5 = xla_tuple %s2, %s3, %s4
  %s6 = sld [smem:[#allocation0]]
  $region38: #{conv_embedding_forward.2} parent=0
    _
  %s8 = ssub.s32 1, %s6
  %s9 = scalar_select 0, %s8, %s6
  // Predicated region
  $region2: #{conv_embedding_forward.2} parent=0 // pred_check
    _
  $region3: #{conv_embedding_forward.2} parent=0 // pred_check_branch
    %11 = sbr.rel (0) target = $region5
  $region4: #{conv_embedding_forward.2} parent=0 // pred_region
    _
  $region5: #{conv_embedding_forward.2} parent=0 // pred_fallthru
    _
  // Predicated region
  $region6: #{conv_embedding_forward.2} parent=0 // pred_check
    _
  $region7: #{conv_embedding_forward.2} parent=0 // pred_check_branch
    %13 = sbr.rel (0) target = $region9
  $region8: #{conv_embedding_forward.2} parent=0 // pred_region
    _
  $region9: #{conv_embedding_forward.2} parent=0 // pred_fallthru
    _
  %p14 = scmp.eq.s32.totalorder 0, 0
  // Predicated region
  $region10: #{conv_embedding_forward.2} parent=0 // pred_check
    %p15 = pneg %p14
  $region11: #{conv_embedding_forward.2} parent=0 // pred_check_branch
    %17 = sbr.rel (%p15) target = $region13
  $region12: #{conv_embedding_forward.2} parent=0 // pred_region
    %vm18 = vcmask 7168
    %19 = vst.msk [vmem:[%s3] sm:$0xff] %vm18, 0.0
    %20 = vst.msk [vmem:[%s3 + $0x8] sm:$0xff] %vm18, 0.0
    %21 = vst.msk [vmem:[%s3 + $0x10] sm:$0xff] %vm18, 0.0
    %22 = vst.msk [vmem:[%s3 + $0x18] sm:$0xff] %vm18, 0.0
    %23 = vst.msk [vmem:[%s3 + $0x20] sm:$0xff] %vm18, 0.0
    %24 = vst.msk [vmem:[%s3 + $0x28] sm:$0xff] %vm18, 0.0
    %25 = vst.msk [vmem:[%s3 + $0x30] sm:$0xff] %vm18, 0.0
    %26 = vst.msk [vmem:[%s3 + $0x38] sm:$0xff] %vm18, 0.0
    %27 = vst.msk [vmem:[%s4] sm:$0xff] %vm18, 0.0
    %28 = vst.msk [vmem:[%s4 + $0x8] sm:$0xff] %vm18, 0.0
    %29 = vst.msk [vmem:[%s4 + $0x10] sm:$0xff] %vm18, 0.0
    %30 = vst.msk [vmem:[%s4 + $0x18] sm:$0xff] %vm18, 0.0
    %31 = vst.msk [vmem:[%s4 + $0x20] sm:$0xff] %vm18, 0.0
    %32 = vst.msk [vmem:[%s4 + $0x28] sm:$0xff] %vm18, 0.0
    %33 = vst.msk [vmem:[%s4 + $0x30] sm:$0xff] %vm18, 0.0
    %34 = vst.msk [vmem:[%s4 + $0x38] sm:$0xff] %vm18, 0.0
  $region13: #{conv_embedding_forward.2} parent=0 // pred_fallthru
    _
  %v35 = vld [vmem:[%s1] sm:$0xff]
  %v36 = vld [vmem:[%s1 + $0x8] sm:$0xff]
  %v37 = vld [vmem:[%s1 + $0x10] sm:$0xff]
  %v38 = vld [vmem:[%s1 + $0x18] sm:$0xff]
  %v39 = vld [vmem:[%s1 + $0x20] sm:$0xff]
  %v40 = vld [vmem:[%s1 + $0x28] sm:$0xff]
  %v41 = vld [vmem:[%s1 + $0x30] sm:$0xff]
  %v42 = vld [vmem:[%s1 + $0x38] sm:$0xff]
  %v43 = vld [vmem:[%s1 + $0x40] sm:$0xff]
  %v44 = vld [vmem:[%s1 + $0x48] sm:$0xff]
  %v45 = vld [vmem:[%s1 + $0x50] sm:$0xff]
  %v46 = vld [vmem:[%s1 + $0x58] sm:$0xff]
  %v47 = vld [vmem:[%s1 + $0x60] sm:$0xff]
  %v48 = vld [vmem:[%s1 + $0x68] sm:$0xff]
  %v49 = vld [vmem:[%s1 + $0x70] sm:$0xff]
  %v50 = vld [vmem:[%s1 + $0x78] sm:$0xff]
  %v51 = vld [vmem:[%s0] sm:$0xff]
  %v52 = vld [vmem:[%s0 + $0x8] sm:$0xff]
  %v53 = vld [vmem:[%s0 + $0x10] sm:$0xff]
  %v54 = vld [vmem:[%s0 + $0x18] sm:$0xff]
  %v55 = vld [vmem:[%s0 + $0x20] sm:$0xff]
  %v56 = vld [vmem:[%s0 + $0x28] sm:$0xff]
  %v57 = vld [vmem:[%s0 + $0x30] sm:$0xff]
  %v58 = vld [vmem:[%s0 + $0x38] sm:$0xff]
  %v59 = vld [vmem:[%s0 + $0x40] sm:$0xff]
  %v60 = vld [vmem:[%s0 + $0x48] sm:$0xff]
  %v61 = vld [vmem:[%s0 + $0x50] sm:$0xff]
  %v62 = vld [vmem:[%s0 + $0x58] sm:$0xff]
  %v63 = vld [vmem:[%s0 + $0x60] sm:$0xff]
  %v64 = vld [vmem:[%s0 + $0x68] sm:$0xff]
  %v65 = vld [vmem:[%s0 + $0x70] sm:$0xff]
  %v66 = vld [vmem:[%s0 + $0x78] sm:$0xff]
  %v67 = vld [vmem:[%s0 + $0x80] sm:$0xff]
  %v68 = vld [vmem:[%s0 + $0x88] sm:$0xff]
  %v69 = vld [vmem:[%s0 + $0x90] sm:$0xff]
  %v70 = vld [vmem:[%s0 + $0x98] sm:$0xff]
  %v71 = vld [vmem:[%s0 + $0xa0] sm:$0xff]
  %v72 = vld [vmem:[%s0 + $0xa8] sm:$0xff]
  %v73 = vld [vmem:[%s0 + $0xb0] sm:$0xff]
  %v74 = vld [vmem:[%s0 + $0xb8] sm:$0xff]
  %v75 = vld [vmem:[%s0 + $0xc0] sm:$0xff]
  %v76 = vld [vmem:[%s0 + $0xc8] sm:$0xff]
  %v77 = vld [vmem:[%s0 + $0xd0] sm:$0xff]
  %v78 = vld [vmem:[%s0 + $0xd8] sm:$0xff]
  %v79 = vld [vmem:[%s0 + $0xe0] sm:$0xff]
  %v80 = vld [vmem:[%s0 + $0xe8] sm:$0xff]
  %v81 = vld [vmem:[%s0 + $0xf0] sm:$0xff]
  %v82 = vld [vmem:[%s0 + $0xf8] sm:$0xff]
  %83 = vmatpush.msra.mxu0 %v66
  %84 = vmatpush.msra.mxu0 %v65
  %85 = vmatpush.msra.mxu0 %v64
  %86 = vmatpush.msra.mxu0 %v63
  %87 = vmatpush.msra.mxu0 %v62
  %88 = vmatpush.msra.mxu0 %v61
  %89 = vmatpush.msra.mxu0 %v60
  %90 = vmatpush.msra.mxu0 %v59
  %91 = vmatpush.msra.mxu0 %v58
  %92 = vmatpush.msra.mxu0 %v57
  %93 = vmatpush.msra.mxu0 %v56
  %94 = vmatpush.msra.mxu0 %v55
  %95 = vmatpush.msra.mxu0 %v54
  %96 = vmatpush.msra.mxu0 %v53
  %97 = vmatpush.msra.mxu0 %v52
  %98 = vmatpush.msra.mxu0 %v51
  %99 = vmatmul.f32.gmra.mxu0 %v35
  %v100 = vpop.f32.mrf.mxu0
  %v101 = vadd.f32 0.0, %v100
  %102 = vmatmul.f32.gmra.mxu0 %v37
  %v103 = vpop.f32.mrf.mxu0
  %v104 = vadd.f32 0.0, %v103
  %105 = vmatmul.f32.gmra.mxu0 %v39
  %v106 = vpop.f32.mrf.mxu0
  %v107 = vadd.f32 0.0, %v106
  %108 = vmatmul.f32.gmra.mxu0 %v41
  %v109 = vpop.f32.mrf.mxu0
  %v110 = vadd.f32 0.0, %v109
  %111 = vmatmul.f32.gmra.mxu0 %v43
  %v112 = vpop.f32.mrf.mxu0
  %v113 = vadd.f32 0.0, %v112
  %114 = vmatmul.f32.gmra.mxu0 %v45
  %v115 = vpop.f32.mrf.mxu0
  %v116 = vadd.f32 0.0, %v115
  %117 = vmatmul.f32.gmra.mxu0 %v47
  %v118 = vpop.f32.mrf.mxu0
  %v119 = vadd.f32 0.0, %v118
  %120 = vmatmul.f32.gmra.mxu0 %v49
  %v121 = vpop.f32.mrf.mxu0
  %v122 = vadd.f32 0.0, %v121
  %123 = vdwg.mxu0
  %124 = vmatpush.msra.mxu0 %v82
  %125 = vmatpush.msra.mxu0 %v81
  %126 = vmatpush.msra.mxu0 %v80
  %127 = vmatpush.msra.mxu0 %v79
  %128 = vmatpush.msra.mxu0 %v78
  %129 = vmatpush.msra.mxu0 %v77
  %130 = vmatpush.msra.mxu0 %v76
  %131 = vmatpush.msra.mxu0 %v75
  %132 = vmatpush.msra.mxu0 %v74
  %133 = vmatpush.msra.mxu0 %v73
  %134 = vmatpush.msra.mxu0 %v72
  %135 = vmatpush.msra.mxu0 %v71
  %136 = vmatpush.msra.mxu0 %v70
  %137 = vmatpush.msra.mxu0 %v69
  %138 = vmatpush.msra.mxu0 %v68
  %139 = vmatpush.msra.mxu0 %v67
  %140 = vmatmul.f32.gmra.mxu0 %v36
  %v141 = vpop.f32.mrf.mxu0
  %v142 = vadd.f32 %v101, %v141
  %143 = vmatmul.f32.gmra.mxu0 %v38
  %v144 = vpop.f32.mrf.mxu0
  %v145 = vadd.f32 %v104, %v144
  %146 = vmatmul.f32.gmra.mxu0 %v40
  %v147 = vpop.f32.mrf.mxu0
  %v148 = vadd.f32 %v107, %v147
  %149 = vmatmul.f32.gmra.mxu0 %v42
  %v150 = vpop.f32.mrf.mxu0
  %v151 = vadd.f32 %v110, %v150
  %152 = vmatmul.f32.gmra.mxu0 %v44
  %v153 = vpop.f32.mrf.mxu0
  %v154 = vadd.f32 %v113, %v153
  %155 = vmatmul.f32.gmra.mxu0 %v46
  %v156 = vpop.f32.mrf.mxu0
  %v157 = vadd.f32 %v116, %v156
  %158 = vmatmul.f32.gmra.mxu0 %v48
  %v159 = vpop.f32.mrf.mxu0
  %v160 = vadd.f32 %v119, %v159
  %161 = vmatmul.f32.gmra.mxu0 %v50
  %v162 = vpop.f32.mrf.mxu0
  %v163 = vadd.f32 %v122, %v162
  %164 = vdwg.mxu0
  %165 = vst [vmem:[%s2] sm:$0xff] %v142
  %166 = vst [vmem:[%s2 + $0x8] sm:$0xff] %v145
  %167 = vst [vmem:[%s2 + $0x10] sm:$0xff] %v148
  %168 = vst [vmem:[%s2 + $0x18] sm:$0xff] %v151
  %169 = vst [vmem:[%s2 + $0x20] sm:$0xff] %v154
  %170 = vst [vmem:[%s2 + $0x28] sm:$0xff] %v157
  %171 = vst [vmem:[%s2 + $0x30] sm:$0xff] %v160
  %172 = vst [vmem:[%s2 + $0x38] sm:$0xff] %v163
  %v173 = vld [vmem:[%s3] sm:$0xff]
  %v174 = vld [vmem:[%s3 + $0x8] sm:$0xff]
  %v175 = vld [vmem:[%s3 + $0x10] sm:$0xff]
  %v176 = vld [vmem:[%s3 + $0x18] sm:$0xff]
  %v177 = vld [vmem:[%s3 + $0x20] sm:$0xff]
  %v178 = vld [vmem:[%s3 + $0x28] sm:$0xff]
  %v179 = vld [vmem:[%s3 + $0x30] sm:$0xff]
  %v180 = vld [vmem:[%s3 + $0x38] sm:$0xff]
  %181 = vadd.xlane.f32.xlu0 %v142
  %v182 = vpop.xlane.xlu0 %181
  %183 = vadd.xlane.f32.xlu0 %v145
  %v184 = vpop.xlane.xlu0 %183
  %185 = vadd.xlane.f32.xlu0 %v148
  %v186 = vpop.xlane.xlu0 %185
  %187 = vadd.xlane.f32.xlu0 %v151
  %v188 = vpop.xlane.xlu0 %187
  %189 = vadd.xlane.f32.xlu0 %v154
  %v190 = vpop.xlane.xlu0 %189
  %191 = vadd.xlane.f32.xlu0 %v157
  %v192 = vpop.xlane.xlu0 %191
  %193 = vadd.xlane.f32.xlu0 %v160
  %v194 = vpop.xlane.xlu0 %193
  %195 = vadd.xlane.f32.xlu0 %v163
  %v196 = vpop.xlane.xlu0 %195
  %v197 = vadd.f32 %v173, %v182
  %v198 = vadd.f32 %v174, %v184
  %v199 = vadd.f32 %v175, %v186
  %v200 = vadd.f32 %v176, %v188
  %v201 = vadd.f32 %v177, %v190
  %v202 = vadd.f32 %v178, %v192
  %v203 = vadd.f32 %v179, %v194
  %v204 = vadd.f32 %v180, %v196
  %vm205 = vcmask 7168
  %206 = vst.msk [vmem:[%s3] sm:$0xff] %vm205, %v197
  %207 = vst.msk [vmem:[%s3 + $0x8] sm:$0xff] %vm205, %v198
  %208 = vst.msk [vmem:[%s3 + $0x10] sm:$0xff] %vm205, %v199
  %209 = vst.msk [vmem:[%s3 + $0x18] sm:$0xff] %vm205, %v200
  %210 = vst.msk [vmem:[%s3 + $0x20] sm:$0xff] %vm205, %v201
  %211 = vst.msk [vmem:[%s3 + $0x28] sm:$0xff] %vm205, %v202
  %212 = vst.msk [vmem:[%s3 + $0x30] sm:$0xff] %vm205, %v203
  %213 = vst.msk [vmem:[%s3 + $0x38] sm:$0xff] %vm205, %v204
  %v214 = vld [vmem:[%s4] sm:$0xff]
  %v215 = vld [vmem:[%s4 + $0x8] sm:$0xff]
  %v216 = vld [vmem:[%s4 + $0x10] sm:$0xff]
  %v217 = vld [vmem:[%s4 + $0x18] sm:$0xff]
  %v218 = vld [vmem:[%s4 + $0x20] sm:$0xff]
  %v219 = vld [vmem:[%s4 + $0x28] sm:$0xff]
  %v220 = vld [vmem:[%s4 + $0x30] sm:$0xff]
  %v221 = vld [vmem:[%s4 + $0x38] sm:$0xff]
  %v222 = vmul.f32 %v142, %v142
  %v223 = vmul.f32 %v145, %v145
  %v224 = vmul.f32 %v148, %v148
  %v225 = vmul.f32 %v151, %v151
  %v226 = vmul.f32 %v154, %v154
  %v227 = vmul.f32 %v157, %v157
  %v228 = vmul.f32 %v160, %v160
  %v229 = vmul.f32 %v163, %v163
  %230 = vadd.xlane.f32.xlu0 %v222
  %v231 = vpop.xlane.xlu0 %230
  %232 = vadd.xlane.f32.xlu0 %v223
  %v233 = vpop.xlane.xlu0 %232
  %234 = vadd.xlane.f32.xlu0 %v224
  %v235 = vpop.xlane.xlu0 %234
  %236 = vadd.xlane.f32.xlu0 %v225
  %v237 = vpop.xlane.xlu0 %236
  %238 = vadd.xlane.f32.xlu0 %v226
  %v239 = vpop.xlane.xlu0 %238
  %240 = vadd.xlane.f32.xlu0 %v227
  %v241 = vpop.xlane.xlu0 %240
  %242 = vadd.xlane.f32.xlu0 %v228
  %v243 = vpop.xlane.xlu0 %242
  %244 = vadd.xlane.f32.xlu0 %v229
  %v245 = vpop.xlane.xlu0 %244
  %v246 = vadd.f32 %v214, %v231
  %v247 = vadd.f32 %v215, %v233
  %v248 = vadd.f32 %v216, %v235
  %v249 = vadd.f32 %v217, %v237
  %v250 = vadd.f32 %v218, %v239
  %v251 = vadd.f32 %v219, %v241
  %v252 = vadd.f32 %v220, %v243
  %v253 = vadd.f32 %v221, %v245
  %254 = vst.msk [vmem:[%s4] sm:$0xff] %vm205, %v246
  %255 = vst.msk [vmem:[%s4 + $0x8] sm:$0xff] %vm205, %v247
  %256 = vst.msk [vmem:[%s4 + $0x10] sm:$0xff] %vm205, %v248
  %257 = vst.msk [vmem:[%s4 + $0x18] sm:$0xff] %vm205, %v249
  %258 = vst.msk [vmem:[%s4 + $0x20] sm:$0xff] %vm205, %v250
  %259 = vst.msk [vmem:[%s4 + $0x28] sm:$0xff] %vm205, %v251
  %260 = vst.msk [vmem:[%s4 + $0x30] sm:$0xff] %vm205, %v252
  %261 = vst.msk [vmem:[%s4 + $0x38] sm:$0xff] %vm205, %v253
  // Predicated region
  $region14: #{conv_embedding_forward.2} parent=0 // pred_check
    _
  $region15: #{conv_embedding_forward.2} parent=0 // pred_check_branch
    %263 = sbr.rel (0) target = $region17
  $region16: #{conv_embedding_forward.2} parent=0 // pred_region
    _
  $region17: #{conv_embedding_forward.2} parent=0 // pred_fallthru
    _
  // Predicated region
  $region18: #{conv_embedding_forward.2} parent=0 // pred_check
    _
  $region19: #{conv_embedding_forward.2} parent=0 // pred_check_branch
    %265 = sbr.rel (0) target = $region21
  $region20: #{conv_embedding_forward.2} parent=0 // pred_region
    _
  $region21: #{conv_embedding_forward.2} parent=0 // pred_fallthru
    _
  // Predicated region
  $region22: #{conv_embedding_forward.2} parent=0 // pred_check
    _
  $region23: #{conv_embedding_forward.2} parent=0 // pred_check_branch
    %267 = sbr.rel (0) target = $region25
  $region24: #{conv_embedding_forward.2} parent=0 // pred_region
    _
  $region25: #{conv_embedding_forward.2} parent=0 // pred_fallthru
    _
  // Predicated region
  $region26: #{conv_embedding_forward.2} parent=0 // pred_check
    _
  $region27: #{conv_embedding_forward.2} parent=0 // pred_check_branch
    %269 = sbr.rel (0) target = $region29
  $region28: #{conv_embedding_forward.2} parent=0 // pred_region
    _
  $region29: #{conv_embedding_forward.2} parent=0 // pred_fallthru
    _
  // Predicated region
  $region30: #{conv_embedding_forward.2} parent=0 // pred_check
    _
  $region31: #{conv_embedding_forward.2} parent=0 // pred_check_branch
    %271 = sbr.rel (0) target = $region33
  $region32: #{conv_embedding_forward.2} parent=0 // pred_region
    _
  $region33: #{conv_embedding_forward.2} parent=0 // pred_fallthru
    _
  // Predicated region
  $region34: #{conv_embedding_forward.2} parent=0 // pred_check
    _
  $region35: #{conv_embedding_forward.2} parent=0 // pred_check_branch
    %273 = sbr.rel (0) target = $region37
  $region36: #{conv_embedding_forward.2} parent=0 // pred_region
    _
  $region37: #{conv_embedding_forward.2} parent=0 // pred_fallthru
    _

// kernel: conv_embedding_forward.3
$region0: #{conv_embedding_forward.3}
  #allocation0 [shape = 'u32[]', space=smem, size = 0x4, offset = 0x4, fixed_abs, tag = 'smem constant byte address 0x4 - core index']
  #allocation1 [shape = 'u32[72,128]{1,0:T(1,128)}', space=vmem, size = 0x9000, scoped, tag = 'internal scratch']
  %s0 = inlined_call_operand.vmem [shape: f32[64,128], index: 0, kind: input, shape index: {}, may-alias: {0,5}]
  %s1 = inlined_call_operand.vmem [shape: f32[64,1], index: 1, kind: input, shape index: {}]
  %s2 = inlined_call_operand.vmem [shape: f32[64,1], index: 2, kind: input, shape index: {}]
  %s3 = inlined_call_operand.vmem [shape: f32[64,1], index: 3, kind: input, shape index: {}]
  %s4 = inlined_call_operand.vmem [shape: f32[64,1], index: 4, kind: input, shape index: {}]
  %s5 = inlined_call_operand.vmem [shape: f32[64,128], index: 5, kind: output, shape index: {}, may-alias: {0,5}]
  %s6 = sld [smem:[#allocation0]]
  $region30: #{conv_embedding_forward.3} parent=0
    _
  %s8 = ssub.s32 1, %s6
  %s9 = scalar_select 0, %s8, %s6
  // Predicated region
  $region2: #{conv_embedding_forward.3} parent=0 // pred_check
    _
  $region3: #{conv_embedding_forward.3} parent=0 // pred_check_branch
    %11 = sbr.rel (0) target = $region5
  $region4: #{conv_embedding_forward.3} parent=0 // pred_region
    _
  $region5: #{conv_embedding_forward.3} parent=0 // pred_fallthru
    _
  // Predicated region
  $region6: #{conv_embedding_forward.3} parent=0 // pred_check
    _
  $region7: #{conv_embedding_forward.3} parent=0 // pred_check_branch
    %13 = sbr.rel (0) target = $region9
  $region8: #{conv_embedding_forward.3} parent=0 // pred_region
    _
  $region9: #{conv_embedding_forward.3} parent=0 // pred_fallthru
    _
  // Predicated region
  $region10: #{conv_embedding_forward.3} parent=0 // pred_check
    _
  $region11: #{conv_embedding_forward.3} parent=0 // pred_check_branch
    %15 = sbr.rel (0) target = $region13
  $region12: #{conv_embedding_forward.3} parent=0 // pred_region
    _
  $region13: #{conv_embedding_forward.3} parent=0 // pred_fallthru
    _
  // Predicated region
  $region14: #{conv_embedding_forward.3} parent=0 // pred_check
    _
  $region15: #{conv_embedding_forward.3} parent=0 // pred_check_branch
    %17 = sbr.rel (0) target = $region17
  $region16: #{conv_embedding_forward.3} parent=0 // pred_region
    _
  $region17: #{conv_embedding_forward.3} parent=0 // pred_fallthru
    _
  // Predicated region
  $region18: #{conv_embedding_forward.3} parent=0 // pred_check
    _
  $region19: #{conv_embedding_forward.3} parent=0 // pred_check_branch
    %19 = sbr.rel (0) target = $region21
  $region20: #{conv_embedding_forward.3} parent=0 // pred_region
    _
  $region21: #{conv_embedding_forward.3} parent=0 // pred_fallthru
    _
  %v20 = vld [vmem:[%s3] sm:$0xff]
  %v21 = vld [vmem:[%s3 + $0x8] sm:$0xff]
  %v22 = vld [vmem:[%s3 + $0x10] sm:$0xff]
  %v23 = vld [vmem:[%s3 + $0x18] sm:$0xff]
  %v24 = vld [vmem:[%s3 + $0x20] sm:$0xff]
  %v25 = vld [vmem:[%s3 + $0x28] sm:$0xff]
  %v26 = vld [vmem:[%s3 + $0x30] sm:$0xff]
  %v27 = vld [vmem:[%s3 + $0x38] sm:$0xff]
  %v28 = vmul.f32 %v20, 0.03125
  %v29 = vmul.f32 %v21, 0.03125
  %v30 = vmul.f32 %v22, 0.03125
  %v31 = vmul.f32 %v23, 0.03125
  %v32 = vmul.f32 %v24, 0.03125
  %v33 = vmul.f32 %v25, 0.03125
  %v34 = vmul.f32 %v26, 0.03125
  %v35 = vmul.f32 %v27, 0.03125
  %v36 = vld [vmem:[%s4] sm:$0xff]
  %v37 = vld [vmem:[%s4 + $0x8] sm:$0xff]
  %v38 = vld [vmem:[%s4 + $0x10] sm:$0xff]
  %v39 = vld [vmem:[%s4 + $0x18] sm:$0xff]
  %v40 = vld [vmem:[%s4 + $0x20] sm:$0xff]
  %v41 = vld [vmem:[%s4 + $0x28] sm:$0xff]
  %v42 = vld [vmem:[%s4 + $0x30] sm:$0xff]
  %v43 = vld [vmem:[%s4 + $0x38] sm:$0xff]
  %v44 = vmul.f32 %v36, 0.03125
  %v45 = vmul.f32 %v37, 0.03125
  %v46 = vmul.f32 %v38, 0.03125
  %v47 = vmul.f32 %v39, 0.03125
  %v48 = vmul.f32 %v40, 0.03125
  %v49 = vmul.f32 %v41, 0.03125
  %v50 = vmul.f32 %v42, 0.03125
  %v51 = vmul.f32 %v43, 0.03125
  %v52 = vmul.f32 %v28, %v28
  %v53 = vmul.f32 %v29, %v29
  %v54 = vmul.f32 %v30, %v30
  %v55 = vmul.f32 %v31, %v31
  %v56 = vmul.f32 %v32, %v32
  %v57 = vmul.f32 %v33, %v33
  %v58 = vmul.f32 %v34, %v34
  %v59 = vmul.f32 %v35, %v35
  %v60 = vsub.f32 %v44, %v52
  %v61 = vsub.f32 %v45, %v53
  %v62 = vsub.f32 %v46, %v54
  %v63 = vsub.f32 %v47, %v55
  %v64 = vsub.f32 %v48, %v56
  %v65 = vsub.f32 %v49, %v57
  %v66 = vsub.f32 %v50, %v58
  %v67 = vsub.f32 %v51, %v59
  %v68 = vmax.f32 %v60, 0.0
  %v69 = vmax.f32 %v61, 0.0
  %v70 = vmax.f32 %v62, 0.0
  %v71 = vmax.f32 %v63, 0.0
  %v72 = vmax.f32 %v64, 0.0
  %v73 = vmax.f32 %v65, 0.0
  %v74 = vmax.f32 %v66, 0.0
  %v75 = vmax.f32 %v67, 0.0
  %v76 = vadd.f32 %v68, 1e-05
  %v77 = vadd.f32 %v69, 1e-05
  %v78 = vadd.f32 %v70, 1e-05
  %v79 = vadd.f32 %v71, 1e-05
  %v80 = vadd.f32 %v72, 1e-05
  %v81 = vadd.f32 %v73, 1e-05
  %v82 = vadd.f32 %v74, 1e-05
  %v83 = vadd.f32 %v75, 1e-05
  %v84 = vrsqrt.pop %v76
  %v85 = vmul.f32 %v84, %v76
  %v86 = vmul.f32 %v85, %v84
  %v87 = vmul.f32 0.5, %v86
  %v88 = vsub.f32 1.5, %v87
  %v89 = vmul.f32 %v84, %v88
  %vm90 = vweird.f32 %v76
  %vm91 = vweird.f32 %v84
  %vm92 = vmor %vm90, %vm91
  %v93 = vsel %vm92, %v84, %v89
  %v94 = vrsqrt.pop %v77
  %v95 = vmul.f32 %v94, %v77
  %v96 = vmul.f32 %v95, %v94
  %v97 = vmul.f32 0.5, %v96
  %v98 = vsub.f32 1.5, %v97
  %v99 = vmul.f32 %v94, %v98
  %vm100 = vweird.f32 %v77
  %vm101 = vweird.f32 %v94
  %vm102 = vmor %vm100, %vm101
  %v103 = vsel %vm102, %v94, %v99
  %v104 = vrsqrt.pop %v78
  %v105 = vmul.f32 %v104, %v78
  %v106 = vmul.f32 %v105, %v104
  %v107 = vmul.f32 0.5, %v106
  %v108 = vsub.f32 1.5, %v107
  %v109 = vmul.f32 %v104, %v108
  %vm110 = vweird.f32 %v78
  %vm111 = vweird.f32 %v104
  %vm112 = vmor %vm110, %vm111
  %v113 = vsel %vm112, %v104, %v109
  %v114 = vrsqrt.pop %v79
  %v115 = vmul.f32 %v114, %v79
  %v116 = vmul.f32 %v115, %v114
  %v117 = vmul.f32 0.5, %v116
  %v118 = vsub.f32 1.5, %v117
  %v119 = vmul.f32 %v114, %v118
  %vm120 = vweird.f32 %v79
  %vm121 = vweird.f32 %v114
  %vm122 = vmor %vm120, %vm121
  %v123 = vsel %vm122, %v114, %v119
  %v124 = vrsqrt.pop %v80
  %v125 = vmul.f32 %v124, %v80
  %v126 = vmul.f32 %v125, %v124
  %v127 = vmul.f32 0.5, %v126
  %v128 = vsub.f32 1.5, %v127
  %v129 = vmul.f32 %v124, %v128
  %vm130 = vweird.f32 %v80
  %vm131 = vweird.f32 %v124
  %vm132 = vmor %vm130, %vm131
  %v133 = vsel %vm132, %v124, %v129
  %v134 = vrsqrt.pop %v81
  %v135 = vmul.f32 %v134, %v81
  %v136 = vmul.f32 %v135, %v134
  %v137 = vmul.f32 0.5, %v136
  %v138 = vsub.f32 1.5, %v137
  %v139 = vmul.f32 %v134, %v138
  %vm140 = vweird.f32 %v81
  %vm141 = vweird.f32 %v134
  %vm142 = vmor %vm140, %vm141
  %v143 = vsel %vm142, %v134, %v139
  %v144 = vrsqrt.pop %v82
  %v145 = vmul.f32 %v144, %v82
  %v146 = vmul.f32 %v145, %v144
  %v147 = vmul.f32 0.5, %v146
  %v148 = vsub.f32 1.5, %v147
  %v149 = vmul.f32 %v144, %v148
  %vm150 = vweird.f32 %v82
  %vm151 = vweird.f32 %v144
  %vm152 = vmor %vm150, %vm151
  %v153 = vsel %vm152, %v144, %v149
  %v154 = vrsqrt.pop %v83
  %v155 = vmul.f32 %v154, %v83
  %v156 = vmul.f32 %v155, %v154
  %v157 = vmul.f32 0.5, %v156
  %v158 = vsub.f32 1.5, %v157
  %v159 = vmul.f32 %v154, %v158
  %vm160 = vweird.f32 %v83
  %vm161 = vweird.f32 %v154
  %vm162 = vmor %vm160, %vm161
  %v163 = vsel %vm162, %v154, %v159
  %v164 = vld [vmem:[%s1] sm:$0xff]
  %v165 = vld [vmem:[%s1 + $0x8] sm:$0xff]
  %v166 = vld [vmem:[%s1 + $0x10] sm:$0xff]
  %v167 = vld [vmem:[%s1 + $0x18] sm:$0xff]
  %v168 = vld [vmem:[%s1 + $0x20] sm:$0xff]
  %v169 = vld [vmem:[%s1 + $0x28] sm:$0xff]
  %v170 = vld [vmem:[%s1 + $0x30] sm:$0xff]
  %v171 = vld [vmem:[%s1 + $0x38] sm:$0xff]
  %v172 = vmul.f32 %v164, %v93
  %v173 = vmul.f32 %v165, %v103
  %v174 = vmul.f32 %v166, %v113
  %v175 = vmul.f32 %v167, %v123
  %v176 = vmul.f32 %v168, %v133
  %v177 = vmul.f32 %v169, %v143
  %v178 = vmul.f32 %v170, %v153
  %v179 = vmul.f32 %v171, %v163
  %v180 = vld [vmem:[%s2] sm:$0xff]
  %v181 = vld [vmem:[%s2 + $0x8] sm:$0xff]
  %v182 = vld [vmem:[%s2 + $0x10] sm:$0xff]
  %v183 = vld [vmem:[%s2 + $0x18] sm:$0xff]
  %v184 = vld [vmem:[%s2 + $0x20] sm:$0xff]
  %v185 = vld [vmem:[%s2 + $0x28] sm:$0xff]
  %v186 = vld [vmem:[%s2 + $0x30] sm:$0xff]
  %v187 = vld [vmem:[%s2 + $0x38] sm:$0xff]
  %v188 = vmul.f32 %v28, %v172
  %v189 = vmul.f32 %v29, %v173
  %v190 = vmul.f32 %v30, %v174
  %v191 = vmul.f32 %v31, %v175
  %v192 = vmul.f32 %v32, %v176
  %v193 = vmul.f32 %v33, %v177
  %v194 = vmul.f32 %v34, %v178
  %v195 = vmul.f32 %v35, %v179
  %v196 = vsub.f32 %v180, %v188
  %v197 = vsub.f32 %v181, %v189
  %v198 = vsub.f32 %v182, %v190
  %v199 = vsub.f32 %v183, %v191
  %v200 = vsub.f32 %v184, %v192
  %v201 = vsub.f32 %v185, %v193
  %v202 = vsub.f32 %v186, %v194
  %v203 = vsub.f32 %v187, %v195
  %v204 = vld [vmem:[%s0] sm:$0xff]
  %v205 = vld [vmem:[%s0 + $0x8] sm:$0xff]
  %v206 = vld [vmem:[%s0 + $0x10] sm:$0xff]
  %v207 = vld [vmem:[%s0 + $0x18] sm:$0xff]
  %v208 = vld [vmem:[%s0 + $0x20] sm:$0xff]
  %v209 = vld [vmem:[%s0 + $0x28] sm:$0xff]
  %v210 = vld [vmem:[%s0 + $0x30] sm:$0xff]
  %v211 = vld [vmem:[%s0 + $0x38] sm:$0xff]
  %213 = vset.pattern.permute.xlu0 0
  %214 = vperm.xlu0 %213, %v172
  %v215 = vpop.permute.xlu0 %214
  %218 = vset.pattern.permute.xlu0 0
  %219 = vperm.xlu0 %218, %v173
  %v220 = vpop.permute.xlu0 %219
  %223 = vset.pattern.permute.xlu0 0
  %224 = vperm.xlu0 %223, %v174
  %v225 = vpop.permute.xlu0 %224
  %228 = vset.pattern.permute.xlu0 0
  %229 = vperm.xlu0 %228, %v175
  %v230 = vpop.permute.xlu0 %229
  %233 = vset.pattern.permute.xlu0 0
  %234 = vperm.xlu0 %233, %v176
  %v235 = vpop.permute.xlu0 %234
  %238 = vset.pattern.permute.xlu0 0
  %239 = vperm.xlu0 %238, %v177
  %v240 = vpop.permute.xlu0 %239
  %243 = vset.pattern.permute.xlu0 0
  %244 = vperm.xlu0 %243, %v178
  %v245 = vpop.permute.xlu0 %244
  %248 = vset.pattern.permute.xlu0 0
  %249 = vperm.xlu0 %248, %v179
  %v250 = vpop.permute.xlu0 %249
  %v252 = vmul.f32 %v204, %v215
  %v253 = vmul.f32 %v205, %v220
  %v254 = vmul.f32 %v206, %v225
  %v255 = vmul.f32 %v207, %v230
  %v256 = vmul.f32 %v208, %v235
  %v257 = vmul.f32 %v209, %v240
  %v258 = vmul.f32 %v210, %v245
  %v259 = vmul.f32 %v211, %v250
  %261 = vset.pattern.permute.xlu0 0
  %262 = vperm.xlu0 %261, %v196
  %v263 = vpop.permute.xlu0 %262
  %266 = vset.pattern.permute.xlu0 0
  %267 = vperm.xlu0 %266, %v197
  %v268 = vpop.permute.xlu0 %267
  %271 = vset.pattern.permute.xlu0 0
  %272 = vperm.xlu0 %271, %v198
  %v273 = vpop.permute.xlu0 %272
  %276 = vset.pattern.permute.xlu0 0
  %277 = vperm.xlu0 %276, %v199
  %v278 = vpop.permute.xlu0 %277
  %281 = vset.pattern.permute.xlu0 0
  %282 = vperm.xlu0 %281, %v200
  %v283 = vpop.permute.xlu0 %282
  %286 = vset.pattern.permute.xlu0 0
  %287 = vperm.xlu0 %286, %v201
  %v288 = vpop.permute.xlu0 %287
  %291 = vset.pattern.permute.xlu0 0
  %292 = vperm.xlu0 %291, %v202
  %v293 = vpop.permute.xlu0 %292
  %296 = vset.pattern.permute.xlu0 0
  %297 = vperm.xlu0 %296, %v203
  %v298 = vpop.permute.xlu0 %297
  %v300 = vadd.f32 %v252, %v263
  %v301 = vadd.f32 %v253, %v268
  %v302 = vadd.f32 %v254, %v273
  %v303 = vadd.f32 %v255, %v278
  %v304 = vadd.f32 %v256, %v283
  %v305 = vadd.f32 %v257, %v288
  %v306 = vadd.f32 %v258, %v293
  %v307 = vadd.f32 %v259, %v298
  %308 = vst [vmem:[%s5] sm:$0xff] %v300
  %309 = vst [vmem:[%s5 + $0x8] sm:$0xff] %v301
  %310 = vst [vmem:[%s5 + $0x10] sm:$0xff] %v302
  %311 = vst [vmem:[%s5 + $0x18] sm:$0xff] %v303
  %312 = vst [vmem:[%s5 + $0x20] sm:$0xff] %v304
  %313 = vst [vmem:[%s5 + $0x28] sm:$0xff] %v305
  %314 = vst [vmem:[%s5 + $0x30] sm:$0xff] %v306
  %315 = vst [vmem:[%s5 + $0x38] sm:$0xff] %v307
  // Predicated region
  $region22: #{conv_embedding_forward.3} parent=0 // pred_check
    _
  $region23: #{conv_embedding_forward.3} parent=0 // pred_check_branch
    %317 = sbr.rel (0) target = $region25
  $region24: #{conv_embedding_forward.3} parent=0 // pred_region
    _
  $region25: #{conv_embedding_forward.3} parent=0 // pred_fallthru
    _
  // Predicated region
  $region26: #{conv_embedding_forward.3} parent=0 // pred_check
    _
  $region27: #{conv_embedding_forward.3} parent=0 // pred_check_branch
    %319 = sbr.rel (0) target = $region29
  $region28: #{conv_embedding_forward.3} parent=0 // pred_region
    _
  $region29: #{conv_embedding_forward.3} parent=0 // pred_fallthru
    _

</llo_original>
